<compile_context>
chip_gen: v5e
topology: v5e:2x2
jax: 0.10.0
libtpu: 0.0.40
codegen_flags: <defaults>
</compile_context>

<pallas_src>
import jax
import jax.numpy as jnp
from jax.experimental import pallas as pl
from jax.experimental.pallas import tpu as pltpu


def _make_kernel(tile_rows: int, n_rows: int):
    """Builds the kernel for a fixed (static) row-tile size."""

    def kernel(idx_ref, t_ref, freqs_ref, out_ref):
        # idx_ref  : (B,) int32, SMEM  (scalar prefetch)
        # t_ref    : (T,) f32,   SMEM  (scalar prefetch)
        # freqs_ref: (1, D) f32, VMEM  (same block every grid step -> resident)
        # out_ref  : (tile_rows, 2*D) f32, VMEM
        r0 = pl.program_id(0) * tile_rows
        freqs = freqs_ref[...]                               # (1, D)

        # Fused gather: t[batch_idx[row]] read as SMEM scalars; ragged last-tile
        # rows are clamped (their writeback is masked by Pallas anyway).
        cols = []
        for i in range(tile_rows):                           # small static unroll
            row = jnp.minimum(r0 + i, n_rows - 1)
            tv = t_ref[idx_ref[row]]
            cols.append(jnp.full((1, 1), tv, dtype=jnp.float32))
        tcol = jnp.concatenate(cols, axis=0)                 # (tile_rows, 1)

        x = tcol * freqs                                     # one broadcast multiply
        # Single lane-dense store: [cos(x) | sin(x)] -> (tile_rows, 2*D)
        out_ref[...] = jnp.concatenate([jnp.cos(x), jnp.sin(x)], axis=-1)

    return kernel


def positional_embedding(t, batch_idx, t_embedding_dim: int = 128):
    """t: (T,) float32 timesteps; batch_idx: (B,) int32 -> (B, 2*D) float32."""
    D = int(t_embedding_dim)
    t = jnp.asarray(t, jnp.float32).reshape(-1)                  # (T,)
    batch_idx = jnp.asarray(batch_idx, jnp.int32).reshape(-1)    # (B,)
    B = batch_idx.shape[0]

    # Identical expression to the reference -> bit-identical frequencies.
    freqs = jnp.power(
        jnp.float32(10000.0),
        -jnp.arange(D, dtype=jnp.float32) / jnp.float32(D),
    ).reshape(1, D)

    # Small batches: one full-B block.  Larger batches: 8-row (sublane-aligned)
    # tiles; the ragged tail is handled by the in-kernel clamp + masked writeback.
    tile_rows = B if B <= 8 else 8
    grid = (pl.cdiv(B, tile_rows),)

    return pl.pallas_call(
        _make_kernel(tile_rows, B),
        out_shape=jax.ShapeDtypeStruct((B, 2 * D), jnp.float32),
        grid_spec=pltpu.PrefetchScalarGridSpec(
            num_scalar_prefetch=2,                      # batch_idx, t -> SMEM
            grid=grid,
            in_specs=[pl.BlockSpec((1, D), lambda b, idx, tt: (0, 0))],
            out_specs=pl.BlockSpec((tile_rows, 2 * D), lambda b, idx, tt: (b, 0)),
        ),
        compiler_params=pltpu.CompilerParams(
            dimension_semantics=("parallel",),
        ),
    )(batch_idx, t, freqs)


def _reference(t, batch_idx, t_embedding_dim: int = 128):
    """Pure-JAX mirror of the PyTorch module."""
    D = t_embedding_dim
    t = jnp.asarray(t, jnp.float32).reshape(-1, 1)
    freqs = jnp.power(10000.0, -jnp.arange(D, dtype=jnp.float32) / D)
    x = t * freqs
    emb = jnp.concatenate([jnp.cos(x), jnp.sin(x)], axis=-1)
    return emb[batch_idx]


if __name__ == "__main__":
    D = 128          # t_embedding_dim (module default)
    T = 8            # number of distinct timesteps
    B = 2            # batch size

    key = jax.random.PRNGKey(0)
    k_t, k_idx = jax.random.split(key)
    t = jax.random.uniform(k_t, (T,), jnp.float32, minval=0.0, maxval=1000.0)
    batch_idx = jax.random.randint(k_idx, (B,), 0, T, dtype=jnp.int32)

    out = jax.block_until_ready(positional_embedding(t, batch_idx, D))
    ref = _reference(t, batch_idx, D)

    assert out.shape == (B, 2 * D), out.shape
    # freqs and t*freqs are bit-identical to the reference; only the trig
    # implementation may differ slightly on hardware for args up to ~1000 rad.
    assert jnp.allclose(out, ref, atol=2e-4, rtol=2e-4), "mismatch vs reference"
    print("KERNEL_OK")
</pallas_src>

<mosaic_0001>
module attributes {stable_mosaic.version = 11 : i64} {
  func.func @kernel(%arg0: i32, %arg1: memref<2xi32, #tpu.memory_space<smem>>, %arg2: memref<8xf32, #tpu.memory_space<smem>>, %arg3: memref<1x128xf32, #tpu.memory_space<vmem>>, %arg4: memref<2x256xf32, #tpu.memory_space<vmem>>) attributes {dimension_semantics = [#tpu.dimension_semantics<parallel>], iteration_bounds = array<i64: 1>, scalar_prefetch = 2 : i64, scratch_operands = 0 : i64, tpu.core_type = #tpu.core_type<tc>, window_params = [{pipeline_mode = #tpu.pipeline_mode<synchronous>, transform_indices = @transform_0, window_bounds = array<i64: 1, 128>}, {transform_indices = @transform_1, window_bounds = array<i64: 2, 256>}]} {
    %c2_i32 = arith.constant 2 : i32
    %0 = arith.muli %arg0, %c2_i32 : i32
    %c0 = arith.constant 0 : index
    %c0_0 = arith.constant 0 : index
    %1 = vector.load %arg3[%c0, %c0_0] : memref<1x128xf32, #tpu.memory_space<vmem>>, vector<1x128xf32>
    %c0_i32 = arith.constant 0 : i32
    %2 = arith.addi %0, %c0_i32 : i32
    %c1_i32 = arith.constant 1 : i32
    %3 = arith.minsi %2, %c1_i32 : i32
    %4 = arith.index_cast %3 : i32 to index
    %5 = memref.load %arg1[%4] : memref<2xi32, #tpu.memory_space<smem>>
    %6 = arith.index_cast %5 : i32 to index
    %7 = memref.load %arg2[%6] : memref<8xf32, #tpu.memory_space<smem>>
    %8 = vector.broadcast %7 : f32 to vector<1x1xf32>
    %c1_i32_1 = arith.constant 1 : i32
    %9 = arith.addi %0, %c1_i32_1 : i32
    %c1_i32_2 = arith.constant 1 : i32
    %10 = arith.minsi %9, %c1_i32_2 : i32
    %11 = arith.index_cast %10 : i32 to index
    %12 = memref.load %arg1[%11] : memref<2xi32, #tpu.memory_space<smem>>
    %13 = arith.index_cast %12 : i32 to index
    %14 = memref.load %arg2[%13] : memref<8xf32, #tpu.memory_space<smem>>
    %15 = vector.broadcast %14 : f32 to vector<1x1xf32>
    %16 = tpu.concatenate %8, %15 in 0 : vector<1x1xf32>, vector<1x1xf32> -> vector<2x1xf32>
    %17 = vector.broadcast %16 : vector<2x1xf32> to vector<2x128xf32>
    %18 = vector.broadcast %1 : vector<1x128xf32> to vector<2x128xf32>
    %19 = arith.mulf %17, %18 : vector<2x128xf32>
    %20 = math.cos %19 : vector<2x128xf32>
    %21 = math.sin %19 : vector<2x128xf32>
    %22 = tpu.concatenate %20, %21 in 1 : vector<2x128xf32>, vector<2x128xf32> -> vector<2x256xf32>
    %c0_3 = arith.constant 0 : index
    %c0_4 = arith.constant 0 : index
    %23 = vector.load %arg4[%c0_3, %c0_4] : memref<2x256xf32, #tpu.memory_space<vmem>>, vector<2x256xf32>
    tpu.vector_store %arg4[%c0_3, %c0_4], %22 {strides = array<i32>} : memref<2x256xf32, #tpu.memory_space<vmem>>, vector<2x256xf32>,
    return
  }
  func.func @transform_0(%arg0: i32, %arg1: memref<2xi32, #tpu.memory_space<smem>>, %arg2: memref<8xf32, #tpu.memory_space<smem>>) -> (i32, i32) {
    %c0_i32 = arith.constant 0 : i32
    %c0_i32_0 = arith.constant 0 : i32
    %c0_i32_1 = arith.constant 0 : i32
    return %c0_i32, %c0_i32_0 : i32, i32
  }
  func.func @transform_1(%arg0: i32, %arg1: memref<2xi32, #tpu.memory_space<smem>>, %arg2: memref<8xf32, #tpu.memory_space<smem>>) -> (i32, i32) {
    %c0_i32 = arith.constant 0 : i32
    %c0_i32_0 = arith.constant 0 : i32
    return %arg0, %c0_i32 : i32, i32
  }
}

</mosaic_0001>

<llo_original>
// kernel: tpu_custom_call.1
$region0: #{tpu_custom_call.1}
  #allocation0 [shape = 'u32[]', space=smem, size = 0x4, offset = 0x4, fixed_abs, tag = 'smem constant byte address 0x4 - core index']
  #allocation1 [shape = 'u32[72,128]{1,0:T(1,128)}', space=vmem, size = 0x9000, scoped, tag = 'internal scratch']
  #allocation2 [shape = 's32[1]{0}', space=sflag, size = 0x4, scoped, tag = 'scoped memory for tpu_custom_call.1']
  #allocation3 [shape = 'u8[512]{0}', space=smem, size = 0x200, scoped, tag = 'prefetched SMEM operand 0']
  #allocation4 [shape = 'u8[512]{0}', space=smem, size = 0x200, scoped, tag = 'prefetched SMEM operand 1']
  %s0 = inlined_call_operand.hbm [shape: s32[2], index: 0, kind: input, shape index: {}]
  %s1 = inlined_call_operand.hbm [shape: f32[8], index: 1, kind: input, shape index: {}]
  %s2 = inlined_call_operand.vmem [shape: f32[1,128], index: 2, kind: input, shape index: {}]
  %s3 = inlined_call_operand.hbm [shape: f32[2,256], index: 3, kind: output, shape index: {}]
  %s4 = sld [smem:[#allocation0]]
  $region14: #{tpu_custom_call.1} parent=0
    _
  %s6 = ssub.s32 1, %s4
  %s7 = scalar_select 0, %s6, %s4
  %s9 = sshll.u32 %s0, 4
  %s10 = int_to_ptr.hbm [resolvable:$true] %s9
  %12 = dma.hbm_to_smem %s10, 16, [#allocation3], [#allocation2]
  %s14 = sshll.u32 %s1, 4
  %s15 = int_to_ptr.hbm [resolvable:$true] %s14
  %17 = dma.hbm_to_smem %s15, 16, [#allocation4], [#allocation2]
  %19 = dma.done [#allocation2], 32
  %20 = sfence
  $region1: #{tpu_custom_call.1} parent=0
    #allocation5 [shape = 'u8[2048]{0}', space=vmem, size = 0x800, scoped, tag = 'output window, operand 0, single buffered']
    #allocation6 [shape = 's32[1]{0}', space=sflag, size = 0x4, scoped, tag = 'scoped memory for tpu_custom_call.1']
    %21 = vsyncpa [#allocation6], 0
    // Predicated region
    $region2: #{tpu_custom_call.1} parent=1 // pred_check
      _
    $region3: #{tpu_custom_call.1} parent=1 // pred_check_branch
      %23 = sbr.rel (0) target = $region5
    $region4: #{tpu_custom_call.1} parent=1 // pred_region
      _
    $region5: #{tpu_custom_call.1} parent=1 // pred_fallthru
      _
    %s24 = smul.u32 0, 2
    %v25 = vld [vmem:[%s2] sm:$0x1]
    %p26 = scmp.lt.s32.totalorder %s24, 1
    %s27 = scalar_select %p26, %s24, 1
    %s28 = sld [smem:[#allocation3 + %s27]]
    %s29 = sld [smem:[#allocation4 + %s28]]
    %v30 = vstv %s29
    %s31 = sadd.s32 %s24, 1
    %p32 = scmp.lt.s32.totalorder %s31, 1
    %s33 = scalar_select %p32, %s31, 1
    %s34 = sld [smem:[#allocation3 + %s33]]
    %s35 = sld [smem:[#allocation4 + %s34]]
    %v36 = vstv %s35
    %vm37 = vcmask 1040384
    %v38 = vsel %vm37, %v30, %v36
    %40 = vset.pattern.permute.xlu0 0
    %41 = vperm.xlu0 %40, %v38
    %v42 = vpop.permute.xlu0 %41
    %v45 = vperm.slane %v25, 0
    %v47 = vmul.f32 %v42, %v45
    %v48 = vand.u32 2147483647, %v47
    %vm49 = vcmp.le.f32.partialorder %v48, 0.7853982
    %vm50 = vcmp.lt.s32.totalorder %v47, 0
    %v51 = vand.u32 %v47, 2139095040
    %v52 = vshrl.u32 %v51, 23
    %v53 = vsub.s32 %v52, 127
    %v54 = vand.u32 2147483647, %v47
    %v55 = vand.u32 %v54, 8388607
    %v56 = vor.u32 %v55, 8388608
    %v57 = vsub.s32 0, %v56
    %v58 = vadd.s32 %v53, 1
    %vm59 = vcmp.gt.s32.totalorder %v58, 0
    %v60 = vsel %vm59, %v58, 0
    %v61 = vshrl.u32 %v60, 5
    %v62 = vand.u32 %v60, 31
    %v63 = vsub.s32 32, %v62
    %v64 = vshrl.u32 683565275, %v63
    %v65 = vshll.u32 683565275, %v62
    %v66 = vshrl.u32 2475754826, %v63
    %v67 = vor.u32 %v65, %v66
    %v68 = vshll.u32 2475754826, %v62
    %v69 = vshrl.u32 2131351028, %v63
    %v70 = vor.u32 %v68, %v69
    %v71 = vshll.u32 2131351028, %v62
    %v72 = vshrl.u32 2102212464, %v63
    %v73 = vor.u32 %v71, %v72
    %v74 = vshll.u32 2102212464, %v62
    %v75 = vshrl.u32 920167782, %v63
    %v76 = vor.u32 %v74, %v75
    %v77 = vshll.u32 920167782, %v62
    %v78 = vshrl.u32 1326507024, %v63
    %v79 = vor.u32 %v77, %v78
    %vm80 = vcmp.lt.s32.totalorder %v61, 1
    %vm81 = vcmp.lt.s32.totalorder %v61, 2
    %vm82 = vcmp.lt.s32.totalorder %v61, 3
    %vm83 = vcmp.lt.s32.totalorder %v61, 4
    %v84 = vsel %vm80, %v64, %v67
    %v85 = vsel %vm83, %v73, 2102212464
    %v86 = vsel %vm82, %v70, %v85
    %v87 = vsel %vm81, %v84, %v86
    %v88 = vsel %vm80, %v67, %v70
    %v89 = vsel %vm83, %v76, 920167782
    %v90 = vsel %vm82, %v73, %v89
    %v91 = vsel %vm81, %v88, %v90
    %v92 = vsel %vm80, %v70, %v73
    %v93 = vsel %vm83, %v79, 1326507024
    %v94 = vsel %vm82, %v76, %v93
    %v95 = vsel %vm81, %v92, %v94
    %v96 = vshll.u32 %v56, 8
    %v97 = vand.u32 %v96, 65535
    %v98 = vshrl.u32 %v96, 16
    %v99 = vand.u32 %v95, 65535
    %v100 = vshrl.u32 %v95, 16
    %v101 = vmul.u32 %v97, %v99
    %v102 = vmul.u32 %v97, %v100
    %v103 = vmul.u32 %v98, %v99
    %v104 = vmul.u32 %v98, %v100
    %v105 = vshll.u32 %v102, 16
    %v106 = vshrl.u32 %v102, 16
    %v107 = vshll.u32 %v103, 16
    %v108 = vshrl.u32 %v103, 16
    %vm109 = vc.u32 %v101, %v105
    %v110 = vsel %vm109, 1, 0
    %v111 = vadd.s32 %v101, %v105
    %v112 = vadd.s32 %v104, %v110
    %vm113 = vc.u32 %v111, %v107
    %v114 = vsel %vm113, 1, 0
    %v115 = vadd.s32 %v111, %v107
    %v116 = vadd.s32 %v112, %v114
    %v117 = vadd.s32 %v116, %v106
    %v118 = vadd.s32 %v117, %v108
    %v119 = vand.u32 %v96, 65535
    %v120 = vshrl.u32 %v96, 16
    %v121 = vand.u32 %v91, 65535
    %v122 = vshrl.u32 %v91, 16
    %v123 = vmul.u32 %v119, %v121
    %v124 = vmul.u32 %v119, %v122
    %v125 = vmul.u32 %v120, %v121
    %v126 = vmul.u32 %v120, %v122
    %v127 = vshll.u32 %v124, 16
    %v128 = vshrl.u32 %v124, 16
    %v129 = vshll.u32 %v125, 16
    %v130 = vshrl.u32 %v125, 16
    %vm131 = vc.u32 %v123, %v127
    %v132 = vsel %vm131, 1, 0
    %v133 = vadd.s32 %v123, %v127
    %v134 = vadd.s32 %v126, %v132
    %vm135 = vc.u32 %v133, %v129
    %v136 = vsel %vm135, 1, 0
    %v137 = vadd.s32 %v133, %v129
    %v138 = vadd.s32 %v134, %v136
    %v139 = vadd.s32 %v138, %v128
    %v140 = vadd.s32 %v139, %v130
    %v141 = vmul.u32 %v96, %v87
    %v142 = vadd.s32 %v118, %v137
    %vm143 = vc.u32 %v118, %v137
    %v144 = vadd.s32 %v140, 1
    %v145 = vsel %vm143, %v144, %v140
    %v146 = vadd.s32 %v141, %v145
    %v147 = vadd.s32 %v146, 536870912
    %v148 = vshrl.u32 %v147, 30
    %v149 = vshll.u32 %v148, 30
    %v150 = vsub.s32 %v146, %v149
    %vm151 = vcmp.lt.s32.totalorder %v150, 0
    %v152 = vsub.s32 0, %v150
    %v153 = vsel %vm151, %v152, %v150
    %v154 = vclz %v153
    %v155 = vsub.s32 %v154, 2
    %vm156 = vcmp.gt.s32.totalorder 0, %v155
    %v157 = vsel %vm156, 0, %v155
    %v158 = vsub.s32 32, %v157
    %v159 = vshll.u32 %v150, %v157
    %v160 = vshrl.u32 %v142, %v158
    %v161 = vor.u32 %v159, %v160
    %v162 = vsub.s32 4294967266, %v157
    %v163 = vadd.s32 %v162, 127
    %v164 = vshll.u32 %v163, 23
    %v165 = vor.u32 4788187, %v164
    %v166 = vand.u32 2147483647, %v165
    %v168 = vcvt.s32.f32 %v161
    %v169 = vmul.f32 %v168, %v166
    %v170 = vxor.u32 %v169, 2147483648
    %v171 = vsel %vm50, %v170, %v169
    %v172 = vsub.s32 4, %v148
    %v173 = vsel %vm50, %v172, %v148
    %v174 = vsel %vm49, %v47, %v171
    %v175 = vsel %vm49, 0, %v173
    %v176 = vmul.f32 %v174, %v174
    %v177 = vmul.f32 %v176, -0.001358992
    %v178 = vadd.f32 %v177, 0.041655596
    %v179 = vmul.f32 %v176, %v178
    %v180 = vadd.f32 %v179, -0.4999988
    %v181 = vmul.f32 %v176, %v180
    %v182 = vadd.f32 1.0, %v181
    %v183 = vmul.f32 %v174, %v174
    %v184 = vmul.f32 %v183, -0.00019511016
    %v185 = vadd.f32 %v184, 0.008332121
    %v186 = vmul.f32 %v183, %v185
    %v187 = vadd.f32 %v186, -0.16666654
    %v188 = vmul.f32 %v183, %v187
    %v189 = vadd.f32 %v188, 1.0
    %v190 = vmul.f32 %v189, %v174
    %vm191 = vweird.f32 %v47
    %v192 = vand.u32 %v175, 3
    %vm193 = vcmp.lt.s32.totalorder %v192, 2
    %vm194 = vcmp.eq.s32.totalorder %v192, 0
    %v195 = vxor.u32 %v190, 2147483648
    %v196 = vsel %vm194, %v182, %v195
    %vm197 = vcmp.eq.s32.totalorder %v192, 2
    %v198 = vxor.u32 %v182, 2147483648
    %v199 = vsel %vm197, %v198, %v190
    %v200 = vsel %vm193, %v196, %v199
    %v201 = vsel %vm191, nan, %v200
    %v202 = vand.u32 2147483647, %v47
    %vm203 = vcmp.le.f32.partialorder %v202, 0.7853982
    %vm204 = vcmp.lt.s32.totalorder %v47, 0
    %v205 = vand.u32 %v47, 2139095040
    %v206 = vshrl.u32 %v205, 23
    %v207 = vsub.s32 %v206, 127
    %v208 = vand.u32 2147483647, %v47
    %v209 = vand.u32 %v208, 8388607
    %v210 = vor.u32 %v209, 8388608
    %v211 = vsub.s32 0, %v210
    %v212 = vadd.s32 %v207, 1
    %vm213 = vcmp.gt.s32.totalorder %v212, 0
    %v214 = vsel %vm213, %v212, 0
    %v215 = vshrl.u32 %v214, 5
    %v216 = vand.u32 %v214, 31
    %v217 = vsub.s32 32, %v216
    %v218 = vshrl.u32 683565275, %v217
    %v219 = vshll.u32 683565275, %v216
    %v220 = vshrl.u32 2475754826, %v217
    %v221 = vor.u32 %v219, %v220
    %v222 = vshll.u32 2475754826, %v216
    %v223 = vshrl.u32 2131351028, %v217
    %v224 = vor.u32 %v222, %v223
    %v225 = vshll.u32 2131351028, %v216
    %v226 = vshrl.u32 2102212464, %v217
    %v227 = vor.u32 %v225, %v226
    %v228 = vshll.u32 2102212464, %v216
    %v229 = vshrl.u32 920167782, %v217
    %v230 = vor.u32 %v228, %v229
    %v231 = vshll.u32 920167782, %v216
    %v232 = vshrl.u32 1326507024, %v217
    %v233 = vor.u32 %v231, %v232
    %vm234 = vcmp.lt.s32.totalorder %v215, 1
    %vm235 = vcmp.lt.s32.totalorder %v215, 2
    %vm236 = vcmp.lt.s32.totalorder %v215, 3
    %vm237 = vcmp.lt.s32.totalorder %v215, 4
    %v238 = vsel %vm234, %v218, %v221
    %v239 = vsel %vm237, %v227, 2102212464
    %v240 = vsel %vm236, %v224, %v239
    %v241 = vsel %vm235, %v238, %v240
    %v242 = vsel %vm234, %v221, %v224
    %v243 = vsel %vm237, %v230, 920167782
    %v244 = vsel %vm236, %v227, %v243
    %v245 = vsel %vm235, %v242, %v244
    %v246 = vsel %vm234, %v224, %v227
    %v247 = vsel %vm237, %v233, 1326507024
    %v248 = vsel %vm236, %v230, %v247
    %v249 = vsel %vm235, %v246, %v248
    %v250 = vshll.u32 %v210, 8
    %v251 = vand.u32 %v250, 65535
    %v252 = vshrl.u32 %v250, 16
    %v253 = vand.u32 %v249, 65535
    %v254 = vshrl.u32 %v249, 16
    %v255 = vmul.u32 %v251, %v253
    %v256 = vmul.u32 %v251, %v254
    %v257 = vmul.u32 %v252, %v253
    %v258 = vmul.u32 %v252, %v254
    %v259 = vshll.u32 %v256, 16
    %v260 = vshrl.u32 %v256, 16
    %v261 = vshll.u32 %v257, 16
    %v262 = vshrl.u32 %v257, 16
    %vm263 = vc.u32 %v255, %v259
    %v264 = vsel %vm263, 1, 0
    %v265 = vadd.s32 %v255, %v259
    %v266 = vadd.s32 %v258, %v264
    %vm267 = vc.u32 %v265, %v261
    %v268 = vsel %vm267, 1, 0
    %v269 = vadd.s32 %v265, %v261
    %v270 = vadd.s32 %v266, %v268
    %v271 = vadd.s32 %v270, %v260
    %v272 = vadd.s32 %v271, %v262
    %v273 = vand.u32 %v250, 65535
    %v274 = vshrl.u32 %v250, 16
    %v275 = vand.u32 %v245, 65535
    %v276 = vshrl.u32 %v245, 16
    %v277 = vmul.u32 %v273, %v275
    %v278 = vmul.u32 %v273, %v276
    %v279 = vmul.u32 %v274, %v275
    %v280 = vmul.u32 %v274, %v276
    %v281 = vshll.u32 %v278, 16
    %v282 = vshrl.u32 %v278, 16
    %v283 = vshll.u32 %v279, 16
    %v284 = vshrl.u32 %v279, 16
    %vm285 = vc.u32 %v277, %v281
    %v286 = vsel %vm285, 1, 0
    %v287 = vadd.s32 %v277, %v281
    %v288 = vadd.s32 %v280, %v286
    %vm289 = vc.u32 %v287, %v283
    %v290 = vsel %vm289, 1, 0
    %v291 = vadd.s32 %v287, %v283
    %v292 = vadd.s32 %v288, %v290
    %v293 = vadd.s32 %v292, %v282
    %v294 = vadd.s32 %v293, %v284
    %v295 = vmul.u32 %v250, %v241
    %v296 = vadd.s32 %v272, %v291
    %vm297 = vc.u32 %v272, %v291
    %v298 = vadd.s32 %v294, 1
    %v299 = vsel %vm297, %v298, %v294
    %v300 = vadd.s32 %v295, %v299
    %v301 = vadd.s32 %v300, 536870912
    %v302 = vshrl.u32 %v301, 30
    %v303 = vshll.u32 %v302, 30
    %v304 = vsub.s32 %v300, %v303
    %vm305 = vcmp.lt.s32.totalorder %v304, 0
    %v306 = vsub.s32 0, %v304
    %v307 = vsel %vm305, %v306, %v304
    %v308 = vclz %v307
    %v309 = vsub.s32 %v308, 2
    %vm310 = vcmp.gt.s32.totalorder 0, %v309
    %v311 = vsel %vm310, 0, %v309
    %v312 = vsub.s32 32, %v311
    %v313 = vshll.u32 %v304, %v311
    %v314 = vshrl.u32 %v296, %v312
    %v315 = vor.u32 %v313, %v314
    %v316 = vsub.s32 4294967266, %v311
    %v317 = vadd.s32 %v316, 127
    %v318 = vshll.u32 %v317, 23
    %v319 = vor.u32 4788187, %v318
    %v320 = vand.u32 2147483647, %v319
    %v322 = vcvt.s32.f32 %v315
    %v323 = vmul.f32 %v322, %v320
    %v324 = vxor.u32 %v323, 2147483648
    %v325 = vsel %vm204, %v324, %v323
    %v326 = vsub.s32 4, %v302
    %v327 = vsel %vm204, %v326, %v302
    %v328 = vsel %vm203, %v47, %v325
    %v329 = vsel %vm203, 0, %v327
    %v330 = vmul.f32 %v328, %v328
    %v331 = vmul.f32 %v330, -0.001358992
    %v332 = vadd.f32 %v331, 0.041655596
    %v333 = vmul.f32 %v330, %v332
    %v334 = vadd.f32 %v333, -0.4999988
    %v335 = vmul.f32 %v330, %v334
    %v336 = vadd.f32 1.0, %v335
    %v337 = vmul.f32 %v328, %v328
    %v338 = vmul.f32 %v337, -0.00019511016
    %v339 = vadd.f32 %v338, 0.008332121
    %v340 = vmul.f32 %v337, %v339
    %v341 = vadd.f32 %v340, -0.16666654
    %v342 = vmul.f32 %v337, %v341
    %v343 = vadd.f32 %v342, 1.0
    %v344 = vmul.f32 %v343, %v328
    %vm345 = vweird.f32 %v47
    %v346 = vadd.s32 %v329, 3
    %v347 = vand.u32 %v346, 3
    %vm348 = vcmp.lt.s32.totalorder %v347, 2
    %vm349 = vcmp.eq.s32.totalorder %v347, 0
    %v350 = vxor.u32 %v344, 2147483648
    %v351 = vsel %vm349, %v336, %v350
    %vm352 = vcmp.eq.s32.totalorder %v347, 2
    %v353 = vxor.u32 %v336, 2147483648
    %v354 = vsel %vm352, %v353, %v344
    %v355 = vsel %vm348, %v351, %v354
    %v356 = vsel %vm345, nan, %v355
    %v359 = vrot.slane %v356, 6
    %vm360 = vcmask 1041408
    %v361 = vsel %vm360, %v201, %v359
    %363 = vst [vmem:[#allocation5] sm:$0xf] %v361
    // Predicated region
    $region6: #{tpu_custom_call.1} parent=1 // pred_check
      _
    $region7: #{tpu_custom_call.1} parent=1 // pred_check_branch
      %365 = sbr.rel (0) target = $region9
    $region8: #{tpu_custom_call.1} parent=1 // pred_region
      %367 = vsyncadd [#allocation6], 0
      %s369 = sshll.u32 [#allocation5], 4
      %s370 = int_to_ptr.vmem [resolvable:$true] %s369
      %s371 = sshll.u32 %s3, 4
      %s372 = int_to_ptr.hbm [resolvable:$true] %s371
      %374 = dma.vmem_to_hbm [thread:$0]  %s370, 64, %s372, [#allocation6]
    $region9: #{tpu_custom_call.1} parent=1 // pred_fallthru
      _
    // Predicated region
    $region10: #{tpu_custom_call.1} parent=1 // pred_check
      _
    $region11: #{tpu_custom_call.1} parent=1 // pred_check_branch
      %376 = sbr.rel (0) target = $region13
    $region12: #{tpu_custom_call.1} parent=1 // pred_region
      %378 = dma.done [#allocation6], 64
    $region13: #{tpu_custom_call.1} parent=1 // pred_fallthru
      _
    %379 = vsyncpa [#allocation6], 1

</llo_original>
